<compile_context>
chip_gen: v7x
topology: tpu7x:2x2x1
jax: 0.10.0
libtpu: 0.0.40
codegen_flags: <defaults>
</compile_context>

<pallas_src>
import jax
import jax.numpy as jnp
from jax.experimental import pallas as pl
from jax.experimental.pallas import tpu as pltpu

IN_F = 2      # fc1 input features
HID_F = 2     # fc1 output / fc2 input features
OUT_F = 1     # fc2 output features

LANE = 128             # lane width
SUB = 8                # sublane granularity
MIN_TILE = LANE * SUB  # 1024: tile granularity for multi-tile grids


def _test_critic_kernel(p_ref, x_ref, o_ref):
    # p_ref: (9,) f32 SMEM -> [w1_00, w1_01, w1_10, w1_11, b1_0, b1_1,
    #                          w2_00, w2_01, b2_0]    (torch [out, in] order)
    # x_ref: (2, S, 128) f32 VMEM -- feature-major, batch dense on (sublane, lane)
    # o_ref: (S, 128)    f32 VMEM -- batch dense on (sublane, lane)

    # Group all scalar (SMEM) reads before any vector work.
    w1_00 = p_ref[0]
    w1_01 = p_ref[1]
    w1_10 = p_ref[2]
    w1_11 = p_ref[3]
    b1_0 = p_ref[4]
    b1_1 = p_ref[5]
    w2_00 = p_ref[6]
    w2_01 = p_ref[7]
    b2_0 = p_ref[8]

    x0 = x_ref[0]          # (S, 128)
    x1 = x_ref[1]          # (S, 128)

    # fc1 (two rows) + Gauss activation: VPU FMAs + EUP exp, fully lane/sublane dense.
    z0 = w1_00 * x0 + w1_01 * x1 + b1_0
    z1 = w1_10 * x0 + w1_11 * x1 + b1_1
    h0 = jnp.exp(-(z0 * z0))
    h1 = jnp.exp(-(z1 * z1))

    # fc2 (single output row).
    o_ref[...] = w2_00 * h0 + w2_01 * h1 + b2_0


def _pack_params(w1, b1, w2, b2):
    return jnp.concatenate(
        [w1.reshape(-1), b1.reshape(-1), w2.reshape(-1), b2.reshape(-1)]
    ).astype(jnp.float32)                       # (9,)


def test_critic_forward_feature_major(x_fm, w1, b1, w2, b2, *, tb=512 * 1024):
    """Fast path: x_fm is feature-major (2, B) f32 (no wrapper-side transpose
    copy needed by this function).  Returns (B, 1) f32.

    tb: batch elements per grid step (rounded to a multiple of 1024).
        Default 512K -> ~6 MiB HBM traffic / step, ~12 MiB double-buffered
        VMEM: fits v5e/v6e/v7x and amortizes per-step pipeline overhead.
    """
    assert x_fm.shape[0] == IN_F
    B = x_fm.shape[1]

    tb = max((tb // MIN_TILE) * MIN_TILE, MIN_TILE)
    if B <= tb:
        # Single tile: pad only to lane width; a block equal to the full array
        # is always a legal block shape (no sublane-multiple-of-8 constraint).
        B_pad = max(-(-B // LANE) * LANE, LANE)
        tb = B_pad
    else:
        B_pad = -(-B // tb) * tb
    grid = (B_pad // tb,)
    s_tile = tb // LANE
    s_total = B_pad // LANE

    x_p = x_fm.astype(jnp.float32)
    if B_pad != B:
        # Zero pad: padded lanes only produce finite exp(-b1^2)-derived
        # garbage, sliced off below.
        x_p = jnp.pad(x_p, ((0, 0), (0, B_pad - B)))
    x_p = x_p.reshape(IN_F, s_total, LANE)      # free (row-major) reshape

    params = _pack_params(w1, b1, w2, b2)

    out_p = pl.pallas_call(
        _test_critic_kernel,
        out_shape=jax.ShapeDtypeStruct((s_total, LANE), jnp.float32),
        grid_spec=pltpu.PrefetchScalarGridSpec(
            num_scalar_prefetch=0,
            grid=grid,
            in_specs=[
                pl.BlockSpec(memory_space=pltpu.MemorySpace.SMEM),      # params
                pl.BlockSpec((IN_F, s_tile, LANE), lambda i: (0, i, 0)),  # x tile
            ],
            out_specs=pl.BlockSpec((s_tile, LANE), lambda i: (i, 0)),
        ),
        compiler_params=pltpu.CompilerParams(
            dimension_semantics=("parallel",),
            vmem_limit_bytes=48 << 20,
        ),
    )(params, x_p)

    # Free reshape back to batch-major; only the batch pad is sliced off.
    return out_p.reshape(B_pad, OUT_F)[:B, :]


def test_critic_forward(x, w1, b1, w2, b2, *, tb=512 * 1024):
    """Convenience wrapper.  x: (B, 2) f32 (torch layout).  w1: (2,2) [out,in],
    b1: (2,), w2: (1,2), b2: (1,).  Returns (B, 1) f32.

    Note: pays one XLA transpose to reach feature-major layout; callers that
    can supply (2, B) directly should use test_critic_forward_feature_major.
    """
    return test_critic_forward_feature_major(x.T, w1, b1, w2, b2, tb=tb)


def _reference(x, w1, b1, w2, b2):
    h = x @ w1.T + b1
    h = jnp.exp(-h * h)
    return h @ w2.T + b2


if __name__ == "__main__":
    key = jax.random.PRNGKey(0)
    kx, k1, k2, k3, k4 = jax.random.split(key, 5)

    B = 8
    x = jax.random.normal(kx, (B, IN_F), jnp.float32)

    # Deterministic parameter init (PyTorch Linear shapes: W[out,in], b[out]).
    bound1 = 1.0 / jnp.sqrt(IN_F)
    w1 = jax.random.uniform(k1, (HID_F, IN_F), jnp.float32, -bound1, bound1)
    b1 = jax.random.uniform(k2, (HID_F,), jnp.float32, -bound1, bound1)
    bound2 = 1.0 / jnp.sqrt(HID_F)
    w2 = jax.random.uniform(k3, (OUT_F, HID_F), jnp.float32, -bound2, bound2)
    b2 = jax.random.uniform(k4, (OUT_F,), jnp.float32, -bound2, bound2)

    # Small-batch (single tile) path.
    out = test_critic_forward(x, w1, b1, w2, b2)
    out = jax.block_until_ready(out)
    ref = _reference(x, w1, b1, w2, b2)
    assert out.shape == (B, OUT_F), out.shape
    assert jnp.allclose(out, ref, atol=1e-5, rtol=1e-5), (out, ref)

    # Multi-tile grid path (small tb forces grid > 1; previously untested).
    B2 = 5000
    x2 = jax.random.normal(kx, (B2, IN_F), jnp.float32)
    out2 = jax.block_until_ready(test_critic_forward(x2, w1, b1, w2, b2, tb=2048))
    ref2 = _reference(x2, w1, b1, w2, b2)
    assert out2.shape == (B2, OUT_F), out2.shape
    assert jnp.allclose(out2, ref2, atol=1e-5, rtol=1e-5)

    print("KERNEL_OK")
</pallas_src>

<mosaic_0001>
module attributes {stable_mosaic.version = 11 : i64} {
  func.func @_test_critic_kernel(%arg0: i32, %arg1: memref<9xf32, #tpu.memory_space<smem>>, %arg2: memref<2x1x128xf32, #tpu.memory_space<vmem>>, %arg3: memref<1x128xf32, #tpu.memory_space<vmem>>) attributes {dimension_semantics = [#tpu.dimension_semantics<parallel>], iteration_bounds = array<i64: 1>, scalar_prefetch = 0 : i64, scratch_operands = 0 : i64, tpu.core_type = #tpu.core_type<tc>, window_params = [{transform_indices = @transform_0, window_bounds = array<i64: 9>}, {transform_indices = @transform_1, window_bounds = array<i64: 2, 1, 128>}, {transform_indices = @transform_2, window_bounds = array<i64: 1, 128>}]} {
    %c0 = arith.constant 0 : index
    %0 = memref.load %arg1[%c0] : memref<9xf32, #tpu.memory_space<smem>>
    %c1 = arith.constant 1 : index
    %1 = memref.load %arg1[%c1] : memref<9xf32, #tpu.memory_space<smem>>
    %c2 = arith.constant 2 : index
    %2 = memref.load %arg1[%c2] : memref<9xf32, #tpu.memory_space<smem>>
    %c3 = arith.constant 3 : index
    %3 = memref.load %arg1[%c3] : memref<9xf32, #tpu.memory_space<smem>>
    %c4 = arith.constant 4 : index
    %4 = memref.load %arg1[%c4] : memref<9xf32, #tpu.memory_space<smem>>
    %c5 = arith.constant 5 : index
    %5 = memref.load %arg1[%c5] : memref<9xf32, #tpu.memory_space<smem>>
    %c6 = arith.constant 6 : index
    %6 = memref.load %arg1[%c6] : memref<9xf32, #tpu.memory_space<smem>>
    %c7 = arith.constant 7 : index
    %7 = memref.load %arg1[%c7] : memref<9xf32, #tpu.memory_space<smem>>
    %c8 = arith.constant 8 : index
    %8 = memref.load %arg1[%c8] : memref<9xf32, #tpu.memory_space<smem>>
    %c0_0 = arith.constant 0 : index
    %c0_1 = arith.constant 0 : index
    %c0_2 = arith.constant 0 : index
    %9 = vector.load %arg2[%c0_0, %c0_1, %c0_2] : memref<2x1x128xf32, #tpu.memory_space<vmem>>, vector<1x1x128xf32>
    %10 = vector.shape_cast %9 : vector<1x1x128xf32> to vector<1x128xf32>
    %c1_3 = arith.constant 1 : index
    %c0_4 = arith.constant 0 : index
    %c0_5 = arith.constant 0 : index
    %11 = vector.load %arg2[%c1_3, %c0_4, %c0_5] : memref<2x1x128xf32, #tpu.memory_space<vmem>>, vector<1x1x128xf32>
    %12 = vector.shape_cast %11 : vector<1x1x128xf32> to vector<1x128xf32>
    %13 = vector.broadcast %0 : f32 to vector<1x128xf32>
    %14 = arith.mulf %13, %10 : vector<1x128xf32>
    %15 = vector.broadcast %1 : f32 to vector<1x128xf32>
    %16 = arith.mulf %15, %12 : vector<1x128xf32>
    %17 = arith.addf %14, %16 : vector<1x128xf32>
    %18 = vector.broadcast %4 : f32 to vector<1x128xf32>
    %19 = arith.addf %17, %18 : vector<1x128xf32>
    %20 = vector.broadcast %2 : f32 to vector<1x128xf32>
    %21 = arith.mulf %20, %10 : vector<1x128xf32>
    %22 = vector.broadcast %3 : f32 to vector<1x128xf32>
    %23 = arith.mulf %22, %12 : vector<1x128xf32>
    %24 = arith.addf %21, %23 : vector<1x128xf32>
    %25 = vector.broadcast %5 : f32 to vector<1x128xf32>
    %26 = arith.addf %24, %25 : vector<1x128xf32>
    %27 = arith.mulf %19, %19 : vector<1x128xf32>
    %cst = arith.constant 0.000000e+00 : f32
    %28 = vector.broadcast %cst : f32 to vector<1x128xf32>
    %29 = arith.subf %28, %27 : vector<1x128xf32>
    %30 = math.exp %29 : vector<1x128xf32>
    %31 = arith.mulf %26, %26 : vector<1x128xf32>
    %cst_6 = arith.constant 0.000000e+00 : f32
    %32 = vector.broadcast %cst_6 : f32 to vector<1x128xf32>
    %33 = arith.subf %32, %31 : vector<1x128xf32>
    %34 = math.exp %33 : vector<1x128xf32>
    %35 = vector.broadcast %6 : f32 to vector<1x128xf32>
    %36 = arith.mulf %35, %30 : vector<1x128xf32>
    %37 = vector.broadcast %7 : f32 to vector<1x128xf32>
    %38 = arith.mulf %37, %34 : vector<1x128xf32>
    %39 = arith.addf %36, %38 : vector<1x128xf32>
    %40 = vector.broadcast %8 : f32 to vector<1x128xf32>
    %41 = arith.addf %39, %40 : vector<1x128xf32>
    %c0_7 = arith.constant 0 : index
    %c0_8 = arith.constant 0 : index
    %42 = vector.load %arg3[%c0_7, %c0_8] : memref<1x128xf32, #tpu.memory_space<vmem>>, vector<1x128xf32>
    tpu.vector_store %arg3[%c0_7, %c0_8], %41 {strides = array<i32>} : memref<1x128xf32, #tpu.memory_space<vmem>>, vector<1x128xf32>,
    return
  }
  func.func @transform_0(%arg0: i32) -> i32 {
    %c0_i32 = arith.constant 0 : i32
    %c0_i32_0 = arith.constant 0 : i32
    return %c0_i32 : i32
  }
  func.func @transform_1(%arg0: i32) -> (i32, i32, i32) {
    %c0_i32 = arith.constant 0 : i32
    %c0_i32_0 = arith.constant 0 : i32
    %c0_i32_1 = arith.constant 0 : i32
    return %c0_i32, %arg0, %c0_i32_0 : i32, i32, i32
  }
  func.func @transform_2(%arg0: i32) -> (i32, i32) {
    %c0_i32 = arith.constant 0 : i32
    %c0_i32_0 = arith.constant 0 : i32
    return %arg0, %c0_i32 : i32, i32
  }
}

</mosaic_0001>

<llo_original>
// kernel: tpu_custom_call.1
$region0: #{tpu_custom_call.1}
  #allocation0 [shape = 'u32[]', space=smem, size = 0x4, offset = 0x4, fixed_abs, tag = 'smem constant byte address 0x4 - core index']
  #allocation1 [shape = 'u32[144,128]{1,0:T(1,128)}', space=vmem, size = 0x12000, scoped, tag = 'internal scratch']
  %s0 = inlined_call_operand.hbm [shape: f32[9], index: 0, kind: input, shape index: {}]
  %s1 = inlined_call_operand.vmem [shape: f32[2,1,128], index: 1, kind: input, shape index: {}]
  %s2 = inlined_call_operand.hbm [shape: f32[1,128], index: 2, kind: output, shape index: {}]
  %s3 = sld [smem:[#allocation0]]
  $region22: #{tpu_custom_call.1} parent=0
    _
  %s5 = ssub.s32 1, %s3
  %s6 = scalar_select 0, %s5, %s3
  $region1: #{tpu_custom_call.1} parent=0
    #allocation2 [shape = 'u8[512]{0}', space=smem, size = 0x200, scoped, tag = 'input window, operand 0, single buffered']
    #allocation3 [shape = 's32[1]{0}', space=sflag, size = 0x4, scoped, tag = 'scoped memory for tpu_custom_call.1']
    #allocation4 [shape = 's32[1]{0}', space=sflag, size = 0x4, scoped, tag = 'scoped memory for tpu_custom_call.1']
    #allocation5 [shape = 'u8[512]{0}', space=vmem, size = 0x400, scoped, tag = 'output window, operand 0, single buffered']
    %7 = vsyncpa [#allocation4], 0
    %8 = vsyncpa [#allocation3], 0
    // Predicated region
    $region2: #{tpu_custom_call.1} parent=1 // pred_check
      _
    $region3: #{tpu_custom_call.1} parent=1 // pred_check_branch
      %10 = sbr.rel (0) target = $region5
    $region4: #{tpu_custom_call.1} parent=1 // pred_region
      %s12 = ssub.s32 16, 16
      %13 = vsyncadd [#allocation4], %s12
      %16 = dma.hbm_to_smem %s0, 16, [#allocation2], [#allocation4]
    $region5: #{tpu_custom_call.1} parent=1 // pred_fallthru
      _
    // Predicated region
    $region6: #{tpu_custom_call.1} parent=1 // pred_check
      _
    $region7: #{tpu_custom_call.1} parent=1 // pred_check_branch
      %18 = sbr.rel (0) target = $region9
    $region8: #{tpu_custom_call.1} parent=1 // pred_region
      _
    $region9: #{tpu_custom_call.1} parent=1 // pred_fallthru
      _
    // Predicated region
    $region10: #{tpu_custom_call.1} parent=1 // pred_check
      _
    $region11: #{tpu_custom_call.1} parent=1 // pred_check_branch
      %20 = sbr.rel (0) target = $region13
    $region12: #{tpu_custom_call.1} parent=1 // pred_region
      %21 = dma.done [#allocation4], 16
    $region13: #{tpu_custom_call.1} parent=1 // pred_fallthru
      _
    %22 = sfence
    %s23 = sld [smem:[#allocation2]]
    %s24 = sld [smem:[#allocation2 + $0x1]]
    %s25 = sld [smem:[#allocation2 + $0x2]]
    %s26 = sld [smem:[#allocation2 + $0x3]]
    %s27 = sld [smem:[#allocation2 + $0x4]]
    %s28 = sld [smem:[#allocation2 + $0x5]]
    %s29 = sld [smem:[#allocation2 + $0x6]]
    %s30 = sld [smem:[#allocation2 + $0x7]]
    %s31 = sld [smem:[#allocation2 + $0x8]]
    %v32 = vld [vmem:[%s1] sm:$0x1]
    %s33 = scalar_lea.vmem %s1, 1
    %v34 = vld [vmem:[%s33] sm:$0x1]
    %v35 = vstv %s23
    %v36 = vmul.f32 %v35, %v32
    %v37 = vstv %s24
    %v38 = vmul.f32 %v37, %v34
    %v39 = vadd.f32 %v36, %v38
    %v40 = vstv %s27
    %v41 = vadd.f32 %v39, %v40
    %v42 = vstv %s25
    %v43 = vmul.f32 %v42, %v32
    %v44 = vstv %s26
    %v45 = vmul.f32 %v44, %v34
    %v46 = vadd.f32 %v43, %v45
    %v47 = vstv %s28
    %v48 = vadd.f32 %v46, %v47
    %v49 = vmul.f32 %v41, %v41
    %v50 = vsub.f32 0.0, %v49
    %v51 = vmul.f32 %v50, 1.442695
    %v52 = vpow.pop %v51
    %v53 = vmul.f32 %v48, %v48
    %v54 = vsub.f32 0.0, %v53
    %v55 = vmul.f32 %v54, 1.442695
    %v56 = vpow.pop %v55
    %v57 = vstv %s29
    %v58 = vmul.f32 %v57, %v52
    %v59 = vstv %s30
    %v60 = vmul.f32 %v59, %v56
    %v61 = vadd.f32 %v58, %v60
    %v62 = vstv %s31
    %v63 = vadd.f32 %v61, %v62
    %64 = vst [vmem:[#allocation5] sm:$0x1] %v63
    // Predicated region
    $region14: #{tpu_custom_call.1} parent=1 // pred_check
      _
    $region15: #{tpu_custom_call.1} parent=1 // pred_check_branch
      %66 = sbr.rel (0) target = $region17
    $region16: #{tpu_custom_call.1} parent=1 // pred_region
      %s68 = ssub.s32 16, 16
      %69 = vsyncadd [#allocation3], %s68
      %s71 = sshll.u32 [#allocation5], 4
      %s72 = int_to_ptr.vmem [resolvable:$true] %s71
      %74 = dma.vmem_to_hbm [thread:$0]  %s72, 16, %s2, [#allocation3]
    $region17: #{tpu_custom_call.1} parent=1 // pred_fallthru
      _
    // Predicated region
    $region18: #{tpu_custom_call.1} parent=1 // pred_check
      _
    $region19: #{tpu_custom_call.1} parent=1 // pred_check_branch
      %76 = sbr.rel (0) target = $region21
    $region20: #{tpu_custom_call.1} parent=1 // pred_region
      %77 = dma.done [#allocation3], 16
    $region21: #{tpu_custom_call.1} parent=1 // pred_fallthru
      _
    %78 = vsyncpa [#allocation3], 1
    %79 = vsyncpa [#allocation4], 1

</llo_original>
